<compile_context>
chip_gen: v7x
topology: tpu7x:2x2x1
jax: 0.10.0
libtpu: 0.0.40
codegen_flags: <defaults>
</compile_context>

<pallas_src>
import jax
# Kept so the returned dtypes match torch exactly (int64 / float64).  If
# downstream consumers accept int32/float32 this flag and the glue casts below
# can be dropped for whole-program speed (TPUs emulate fp64).
jax.config.update("jax_enable_x64", True)

import jax.numpy as jnp
from jax import lax
from jax.experimental import pallas as pl
from jax.experimental.pallas import tpu as pltpu

_LANES = 128  # lane-dense output row width


def _output_a_kernel(c_ref, a_ref, out_ref):
    # float -> int cast truncates toward zero, matching torch .type(torch.int64)
    # for values in int32 range.
    # TODO(synk): the add/truncation are int32 here (Pallas TPU has no int64);
    # results diverge from torch only if values exceed int32 range.
    a_i32 = a_ref[...].astype(jnp.int32)                          # (1, 128)
    col = lax.broadcasted_iota(jnp.int32, a_i32.shape, 1)
    out_ref[...] = a_i32 + jnp.where(col == 0, c_ref[0], 0)


def many_input_output(a, b, c):
    """JAX wrapper matching ManyInputOutputModel.forward(a, b, c)."""
    # ---- output_b: pure reshape + widen; stays in XLA (no kernel work) ----
    output_b = b.reshape(1, 2, 3, 4, 5).astype(jnp.float64)

    # ---- output_a: Pallas kernel over a lane-dense 128-wide row ----
    a_flat = a.reshape(-1).astype(jnp.float32)                    # (100,)
    a_row = jnp.pad(a_flat, (0, _LANES - a_flat.shape[0])).reshape(1, _LANES)
    c0_i32 = c.reshape(-1)[:1].astype(jnp.int32)                  # truncate in glue

    out_row = pl.pallas_call(
        _output_a_kernel,
        out_shape=jax.ShapeDtypeStruct((1, _LANES), jnp.int32),
        in_specs=[
            pl.BlockSpec(memory_space=pltpu.MemorySpace.SMEM),    # c0 (scalar)
            pl.BlockSpec(memory_space=pltpu.MemorySpace.VMEM),    # a  (1, 128)
        ],
        out_specs=pl.BlockSpec(memory_space=pltpu.MemorySpace.VMEM),
        cost_estimate=pl.CostEstimate(
            flops=3 * _LANES, transcendentals=0,
            bytes_accessed=2 * _LANES * 4 + 4),
    )(c0_i32, a_row)

    # Widening to int64 happens in glue (64-bit not supported inside the kernel).
    output_a = out_row[0, :100].reshape(10, 10).astype(jnp.int64)
    return output_a, output_b


if __name__ == "__main__":
    key = jax.random.PRNGKey(0)
    ka, kb, kc = jax.random.split(key, 3)

    # Shapes implied by the forward pass: a has 100 elements, b has 120,
    # c is indexable at position 0.
    a = jax.random.normal(ka, (100,), dtype=jnp.float32) * 10.0
    b = jax.random.normal(kb, (120,), dtype=jnp.float32)
    c = jax.random.normal(kc, (3,), dtype=jnp.float32) * 5.0

    out_a, out_b = many_input_output(a, b, c)
    jax.block_until_ready((out_a, out_b))

    assert out_a.shape == (10, 10) and out_a.dtype == jnp.int64
    assert out_b.shape == (1, 2, 3, 4, 5) and out_b.dtype == jnp.float64

    # Semantic spot-checks against the reference formula.
    expected_00 = jnp.int64(jnp.trunc(a[0])) + jnp.int64(jnp.trunc(c[0]))
    assert int(out_a[0, 0]) == int(expected_00)
    assert int(out_a[0, 1]) == int(jnp.trunc(a[1]))
    assert int(out_a[1, 1]) == int(jnp.trunc(a[11]))
    assert jnp.allclose(out_b.reshape(-1), b.astype(jnp.float64))

    print("KERNEL_OK")
</pallas_src>

<mosaic_0001>
module attributes {stable_mosaic.version = 11 : i64} {
  func.func @_output_a_kernel(%arg0: memref<1xi32, #tpu.memory_space<smem>>, %arg1: memref<1x128xf32, #tpu.memory_space<vmem>>, %arg2: memref<1x128xi32, #tpu.memory_space<vmem>>) attributes {dimension_semantics = [], scalar_prefetch = 0 : i64, scratch_operands = 0 : i64, tpu.core_type = #tpu.core_type<tc>} {
    %c0 = arith.constant 0 : index
    %c0_0 = arith.constant 0 : index
    %0 = vector.load %arg1[%c0, %c0_0] : memref<1x128xf32, #tpu.memory_space<vmem>>, vector<1x128xf32>
    %1 = arith.fptosi %0 : vector<1x128xf32> to vector<1x128xi32>
    %2 = tpu.iota {dimensions = array<i32: 1>} : vector<1x128xi32>
    %c0_i32 = arith.constant 0 : i32
    %3 = vector.broadcast %c0_i32 : i32 to vector<1x128xi32>
    %4 = arith.cmpi eq, %2, %3 : vector<1x128xi32>
    %c0_1 = arith.constant 0 : index
    %5 = memref.load %arg0[%c0_1] : memref<1xi32, #tpu.memory_space<smem>>
    %c0_i64 = arith.constant 0 : i64
    %6 = arith.trunci %c0_i64 : i64 to i32
    %7 = vector.broadcast %5 : i32 to vector<1x128xi32>
    %8 = vector.broadcast %6 : i32 to vector<1x128xi32>
    %9 = arith.select %4, %7, %8 : vector<1x128xi1>, vector<1x128xi32>
    %10 = arith.addi %1, %9 : vector<1x128xi32>
    %c0_2 = arith.constant 0 : index
    %c0_3 = arith.constant 0 : index
    %11 = vector.load %arg2[%c0_2, %c0_3] : memref<1x128xi32, #tpu.memory_space<vmem>>, vector<1x128xi32>
    tpu.vector_store %arg2[%c0_2, %c0_3], %10 {strides = array<i32>} : memref<1x128xi32, #tpu.memory_space<vmem>>, vector<1x128xi32>,
    return
  }
}

</mosaic_0001>

<llo_original>
// kernel: tpu_custom_call.1
$region0: #{tpu_custom_call.1}
  #allocation0 [shape = 'u32[]', space=smem, size = 0x4, offset = 0x4, fixed_abs, tag = 'smem constant byte address 0x4 - core index']
  #allocation1 [shape = 'u32[144,128]{1,0:T(1,128)}', space=vmem, size = 0x12000, scoped, tag = 'internal scratch']
  #allocation2 [shape = 's32[1]{0:T(128)S(6)}', space=smem, size = 0x200, scoped, tag = 'scoped memory for tpu_custom_call.1']
  %s0 = inlined_call_operand.<no memory space> [shape: s32[1], index: 0, kind: input, shape index: {}]
  %s1 = inlined_call_operand.vmem [shape: f32[1,128], index: 1, kind: input, shape index: {}]
  %s2 = inlined_call_operand.hbm [shape: s32[1,128], index: 2, kind: output, shape index: {}]
  %s3 = sld [smem:[#allocation0]]
  $region18: #{tpu_custom_call.1} parent=0
    _
  %s5 = ssub.s32 1, %s3
  %s6 = scalar_select 0, %s5, %s3
  %7 = sst [smem:[#allocation2]] %s0
  $region1: #{tpu_custom_call.1} parent=0
    #allocation3 [shape = 'u8[512]{0}', space=vmem, size = 0x400, scoped, tag = 'output window, operand 0, single buffered']
    #allocation4 [shape = 's32[1]{0}', space=sflag, size = 0x4, scoped, tag = 'scoped memory for tpu_custom_call.1']
    %8 = vsyncpa [#allocation4], 0
    // Predicated region
    $region2: #{tpu_custom_call.1} parent=1 // pred_check
      _
    $region3: #{tpu_custom_call.1} parent=1 // pred_check_branch
      %10 = sbr.rel (0) target = $region5
    $region4: #{tpu_custom_call.1} parent=1 // pred_region
      _
    $region5: #{tpu_custom_call.1} parent=1 // pred_fallthru
      _
    // Predicated region
    $region6: #{tpu_custom_call.1} parent=1 // pred_check
      _
    $region7: #{tpu_custom_call.1} parent=1 // pred_check_branch
      %12 = sbr.rel (0) target = $region9
    $region8: #{tpu_custom_call.1} parent=1 // pred_region
      _
    $region9: #{tpu_custom_call.1} parent=1 // pred_fallthru
      _
    %v13 = vld [vmem:[%s1] sm:$0x1]
    %v14 = vcvt.f32.s32.to.zero.pseudo %v13
    %v15 = vlaneseq
    %v16 = vand.u32 %v15, 127
    %vm17 = vcmp.eq.s32.totalorder %v16, 0
    %s18 = sld [smem:[#allocation2]]
    %v19 = vstv %s18
    %v20 = vsel %vm17, %v19, 0
    %v21 = vadd.s32 %v14, %v20
    %22 = vst [vmem:[#allocation3] sm:$0x1] %v21
    // Predicated region
    $region10: #{tpu_custom_call.1} parent=1 // pred_check
      _
    $region11: #{tpu_custom_call.1} parent=1 // pred_check_branch
      %24 = sbr.rel (0) target = $region13
    $region12: #{tpu_custom_call.1} parent=1 // pred_region
      %s26 = ssub.s32 16, 16
      %27 = vsyncadd [#allocation4], %s26
      %s29 = sshll.u32 [#allocation3], 4
      %s30 = int_to_ptr.vmem [resolvable:$true] %s29
      %32 = dma.vmem_to_hbm [thread:$0]  %s30, 16, %s2, [#allocation4]
    $region13: #{tpu_custom_call.1} parent=1 // pred_fallthru
      _
    // Predicated region
    $region14: #{tpu_custom_call.1} parent=1 // pred_check
      _
    $region15: #{tpu_custom_call.1} parent=1 // pred_check_branch
      %34 = sbr.rel (0) target = $region17
    $region16: #{tpu_custom_call.1} parent=1 // pred_region
      %35 = dma.done [#allocation4], 16
    $region17: #{tpu_custom_call.1} parent=1 // pred_fallthru
      _
    %36 = vsyncpa [#allocation4], 1

</llo_original>
